<compile_context>
chip_gen: v6e
topology: v6e:2x2x1
jax: 0.10.0
libtpu: 0.0.40
codegen_flags: <defaults>
</compile_context>

<pallas_src>
import functools

import jax
import jax.numpy as jnp
from jax.experimental import pallas as pl
from jax.experimental.pallas import tpu as pltpu

LANE = 128


def _fused_actor_critic_kernel(x_ref, w1_ref, b1_ref, w2_ref, b2_ref,
                               w3_ref, b3_ref, out_ref):
    """out = relu(relu(x@W1+b1)@W2+b2)@W3 + b3 (actor+critic fused, lane-dense)."""
    x = x_ref[...]
    h = jnp.dot(x, w1_ref[...], preferred_element_type=jnp.float32) + b1_ref[...]
    h = jnp.maximum(h, 0.0)
    h = jnp.dot(h, w2_ref[...], preferred_element_type=jnp.float32) + b2_ref[...]
    h = jnp.maximum(h, 0.0)
    y = jnp.dot(h, w3_ref[...], preferred_element_type=jnp.float32) + b3_ref[...]
    out_ref[...] = y.astype(out_ref.dtype)


def _round_up(x, m):
    return ((x + m - 1) // m) * m


def fused_actor_critic(x, w1, b1, w2, b2, w3, b3, *, tm=None):
    """Run the fused actor+critic 3-layer MLP as one Pallas kernel, tiled over batch."""
    B, obs = x.shape
    out_pad = w3.shape[1]          # lane-dense (multiple of 128)
    if tm is None:
        # Big tiles: amortize per-grid-step overhead; whole batch in one block
        # when small.  512x128 f32 output block (+double-buffered x) is far
        # below even v7x's 64 MiB VMEM.
        tm = min(512, _round_up(B, 8))
    grid = (pl.cdiv(B, tm),)

    xmap = lambda i: (i, 0)        # batch-tiled operands
    wmap = lambda i: (0, 0)        # weights: same block every step (no re-DMA)

    return pl.pallas_call(
        _fused_actor_critic_kernel,
        out_shape=jax.ShapeDtypeStruct((B, out_pad), jnp.float32),
        grid_spec=pltpu.PrefetchScalarGridSpec(
            num_scalar_prefetch=0,
            grid=grid,
            in_specs=[
                pl.BlockSpec((tm, obs), xmap),
                pl.BlockSpec(w1.shape, wmap),
                pl.BlockSpec(b1.shape, wmap),
                pl.BlockSpec(w2.shape, wmap),
                pl.BlockSpec(b2.shape, wmap),
                pl.BlockSpec(w3.shape, wmap),
                pl.BlockSpec(b3.shape, wmap),
            ],
            out_specs=pl.BlockSpec((tm, out_pad), xmap),
        ),
        compiler_params=pltpu.CompilerParams(
            dimension_semantics=("parallel",)),
    )(x, w1, b1, w2, b2, w3, b3)


@functools.partial(jax.jit, static_argnames=("num_outputs",))
def dense_forward(obs, w1, b1, w2, b2, w3, b3, *, num_outputs):
    """Single jitted forward producing (action_logits, value) from one kernel launch."""
    out = fused_actor_critic(obs, w1, b1, w2, b2, w3, b3)
    action = out[:, :num_outputs]
    value = out[:, num_outputs]
    return action, value


def init_linear(key, fan_in, fan_out):
    """Deterministic Linear init (uniform +/- 1/sqrt(fan_in), like torch default)."""
    kw, kb = jax.random.split(key)
    bound = 1.0 / jnp.sqrt(jnp.float32(fan_in))
    w = jax.random.uniform(kw, (fan_in, fan_out), jnp.float32, -bound, bound)
    b = jax.random.uniform(kb, (1, fan_out), jnp.float32, -bound, bound)
    return w, b


class DensePallas:
    """JAX/Pallas equivalent of the rllib Dense model (hidden layers [64, 64])."""

    def __init__(self, observation_size, num_outputs,
                 configuration_hidden_layers=(64, 64), seed=0):
        assert len(configuration_hidden_layers) == 2, \
            "kernel is fused for the default 2 hidden layers"
        h0, h1 = configuration_hidden_layers
        self.num_outputs = num_outputs
        keys = jax.random.split(jax.random.PRNGKey(seed), 6)

        # actor_layers: Linear(obs,h0) ReLU Linear(h0,h1) ReLU ; action_layer: Linear(h1, num_outputs)
        self.a_w1, self.a_b1 = init_linear(keys[0], observation_size, h0)
        self.a_w2, self.a_b2 = init_linear(keys[1], h0, h1)
        self.a_w3, self.a_b3 = init_linear(keys[2], h1, num_outputs)
        # critic_layers: Linear(obs,h0) ReLU Linear(h0,h1) ReLU Linear(h1,1)
        self.c_w1, self.c_b1 = init_linear(keys[3], observation_size, h0)
        self.c_w2, self.c_b2 = init_linear(keys[4], h0, h1)
        self.c_w3, self.c_b3 = init_linear(keys[5], h1, 1)

        # ---- build fused, lane-dense weights (done once) ----
        # hidden1 = [actor h0 | critic h0]; hidden2 = [actor h1 | critic h1]
        out_pad = _round_up(num_outputs + 1, LANE)   # 128 for small heads
        self.out_pad = out_pad

        self.f_w1 = jnp.concatenate([self.a_w1, self.c_w1], axis=1)          # (obs, 2*h0)
        self.f_b1 = jnp.concatenate([self.a_b1, self.c_b1], axis=1)          # (1, 2*h0)

        w2 = jnp.zeros((2 * h0, 2 * h1), jnp.float32)                        # block-diag
        w2 = w2.at[:h0, :h1].set(self.a_w2)
        w2 = w2.at[h0:, h1:].set(self.c_w2)
        self.f_w2 = w2
        self.f_b2 = jnp.concatenate([self.a_b2, self.c_b2], axis=1)          # (1, 2*h1)

        w3 = jnp.zeros((2 * h1, out_pad), jnp.float32)                       # lane-dense out
        w3 = w3.at[:h1, :num_outputs].set(self.a_w3)                         # actor logits
        w3 = w3.at[h1:, num_outputs:num_outputs + 1].set(self.c_w3)          # value column
        self.f_w3 = w3
        b3 = jnp.zeros((1, out_pad), jnp.float32)
        b3 = b3.at[:, :num_outputs].set(self.a_b3)
        b3 = b3.at[:, num_outputs:num_outputs + 1].set(self.c_b3)
        self.f_b3 = b3

        self.flatten_observation = None
        self._cached_value = None

    def forward(self, obs_flat):
        self.flatten_observation = obs_flat
        action, value = dense_forward(
            obs_flat, self.f_w1, self.f_b1, self.f_w2, self.f_b2,
            self.f_w3, self.f_b3, num_outputs=self.num_outputs)
        self._cached_value = value           # computed in the same kernel launch
        return action, []

    def value_function(self):
        return jnp.reshape(self._cached_value, (-1,))


def _ref_mlp3(x, w1, b1, w2, b2, w3, b3):
    h = jnp.maximum(x @ w1 + b1, 0.0)
    h = jnp.maximum(h @ w2 + b2, 0.0)
    return h @ w3 + b3


def _check(model, obs):
    action, _ = model.forward(obs)
    value = model.value_function()
    jax.block_until_ready(action)
    jax.block_until_ready(value)

    ref_action = _ref_mlp3(obs, model.a_w1, model.a_b1, model.a_w2, model.a_b2,
                           model.a_w3, model.a_b3)
    ref_value = _ref_mlp3(obs, model.c_w1, model.c_b1, model.c_w2, model.c_b2,
                          model.c_w3, model.c_b3).reshape(-1)

    assert action.shape == (obs.shape[0], model.num_outputs)
    assert value.shape == (obs.shape[0],)
    assert jnp.allclose(action, ref_action, atol=1e-5, rtol=1e-5)
    assert jnp.allclose(value, ref_value, atol=1e-5, rtol=1e-5)


if __name__ == "__main__":
    OBS = 32         # flattened observation size
    NUM_OUTPUTS = 4  # action size

    model = DensePallas(OBS, NUM_OUTPUTS, configuration_hidden_layers=(64, 64), seed=0)

    key = jax.random.PRNGKey(0)
    k_small, k_big = jax.random.split(key)

    # Small batch: whole batch in a single block.
    obs_small = jax.random.normal(k_small, (8, OBS), jnp.float32)
    _check(model, obs_small)

    # Larger, non-multiple-of-tile batch: exercises multi-step parallel grid
    # and a partial last tile (garbage padded rows never reach valid outputs).
    obs_big = jax.random.normal(k_big, (520, OBS), jnp.float32)
    _check(model, obs_big)

    print("KERNEL_OK")
</pallas_src>

<mosaic_0001>
module attributes {stable_mosaic.version = 11 : i64} {
  func.func @_fused_actor_critic_kernel(%arg0: i32, %arg1: memref<8x32xf32, #tpu.memory_space<vmem>>, %arg2: memref<32x128xf32, #tpu.memory_space<vmem>>, %arg3: memref<1x128xf32, #tpu.memory_space<vmem>>, %arg4: memref<128x128xf32, #tpu.memory_space<vmem>>, %arg5: memref<1x128xf32, #tpu.memory_space<vmem>>, %arg6: memref<128x128xf32, #tpu.memory_space<vmem>>, %arg7: memref<1x128xf32, #tpu.memory_space<vmem>>, %arg8: memref<8x128xf32, #tpu.memory_space<vmem>>) attributes {dimension_semantics = [#tpu.dimension_semantics<parallel>], iteration_bounds = array<i64: 1>, scalar_prefetch = 0 : i64, scratch_operands = 0 : i64, tpu.core_type = #tpu.core_type<tc>, window_params = [{transform_indices = @transform_0, window_bounds = array<i64: 8, 32>}, {pipeline_mode = #tpu.pipeline_mode<synchronous>, transform_indices = @transform_1, window_bounds = array<i64: 32, 128>}, {pipeline_mode = #tpu.pipeline_mode<synchronous>, transform_indices = @transform_2, window_bounds = array<i64: 1, 128>}, {pipeline_mode = #tpu.pipeline_mode<synchronous>, transform_indices = @transform_3, window_bounds = array<i64: 128, 128>}, {pipeline_mode = #tpu.pipeline_mode<synchronous>, transform_indices = @transform_4, window_bounds = array<i64: 1, 128>}, {pipeline_mode = #tpu.pipeline_mode<synchronous>, transform_indices = @transform_5, window_bounds = array<i64: 128, 128>}, {pipeline_mode = #tpu.pipeline_mode<synchronous>, transform_indices = @transform_6, window_bounds = array<i64: 1, 128>}, {transform_indices = @transform_7, window_bounds = array<i64: 8, 128>}]} {
    %c0 = arith.constant 0 : index
    %c0_0 = arith.constant 0 : index
    %0 = vector.load %arg1[%c0, %c0_0] : memref<8x32xf32, #tpu.memory_space<vmem>>, vector<8x32xf32>
    %c0_1 = arith.constant 0 : index
    %c0_2 = arith.constant 0 : index
    %1 = vector.load %arg2[%c0_1, %c0_2] : memref<32x128xf32, #tpu.memory_space<vmem>>, vector<32x128xf32>
    %cst = arith.constant dense<0.000000e+00> : vector<8x128xf32>
    %2 = tpu.matmul %0, %1, %cst {dimension_numbers = #tpu.dot_dimension_numbers<[1], [0], [0], [1], [0, 0, 1, 1], [], []>} : vector<8x32xf32>, vector<32x128xf32>, vector<8x128xf32> -> vector<8x128xf32>
    %c0_3 = arith.constant 0 : index
    %c0_4 = arith.constant 0 : index
    %3 = vector.load %arg3[%c0_3, %c0_4] : memref<1x128xf32, #tpu.memory_space<vmem>>, vector<1x128xf32>
    %4 = vector.broadcast %3 : vector<1x128xf32> to vector<8x128xf32>
    %5 = arith.addf %2, %4 : vector<8x128xf32>
    %cst_5 = arith.constant 0.000000e+00 : f32
    %6 = vector.broadcast %cst_5 : f32 to vector<8x128xf32>
    %7 = arith.maximumf %5, %6 : vector<8x128xf32>
    %c0_6 = arith.constant 0 : index
    %c0_7 = arith.constant 0 : index
    %8 = vector.load %arg4[%c0_6, %c0_7] : memref<128x128xf32, #tpu.memory_space<vmem>>, vector<128x128xf32>
    %cst_8 = arith.constant dense<0.000000e+00> : vector<8x128xf32>
    %9 = tpu.matmul %7, %8, %cst_8 {dimension_numbers = #tpu.dot_dimension_numbers<[1], [0], [0], [1], [0, 0, 1, 1], [], []>} : vector<8x128xf32>, vector<128x128xf32>, vector<8x128xf32> -> vector<8x128xf32>
    %c0_9 = arith.constant 0 : index
    %c0_10 = arith.constant 0 : index
    %10 = vector.load %arg5[%c0_9, %c0_10] : memref<1x128xf32, #tpu.memory_space<vmem>>, vector<1x128xf32>
    %11 = vector.broadcast %10 : vector<1x128xf32> to vector<8x128xf32>
    %12 = arith.addf %9, %11 : vector<8x128xf32>
    %cst_11 = arith.constant 0.000000e+00 : f32
    %13 = vector.broadcast %cst_11 : f32 to vector<8x128xf32>
    %14 = arith.maximumf %12, %13 : vector<8x128xf32>
    %c0_12 = arith.constant 0 : index
    %c0_13 = arith.constant 0 : index
    %15 = vector.load %arg6[%c0_12, %c0_13] : memref<128x128xf32, #tpu.memory_space<vmem>>, vector<128x128xf32>
    %cst_14 = arith.constant dense<0.000000e+00> : vector<8x128xf32>
    %16 = tpu.matmul %14, %15, %cst_14 {dimension_numbers = #tpu.dot_dimension_numbers<[1], [0], [0], [1], [0, 0, 1, 1], [], []>} : vector<8x128xf32>, vector<128x128xf32>, vector<8x128xf32> -> vector<8x128xf32>
    %c0_15 = arith.constant 0 : index
    %c0_16 = arith.constant 0 : index
    %17 = vector.load %arg7[%c0_15, %c0_16] : memref<1x128xf32, #tpu.memory_space<vmem>>, vector<1x128xf32>
    %18 = vector.broadcast %17 : vector<1x128xf32> to vector<8x128xf32>
    %19 = arith.addf %16, %18 : vector<8x128xf32>
    %c0_17 = arith.constant 0 : index
    %c0_18 = arith.constant 0 : index
    %20 = vector.load %arg8[%c0_17, %c0_18] : memref<8x128xf32, #tpu.memory_space<vmem>>, vector<8x128xf32>
    tpu.vector_store %arg8[%c0_17, %c0_18], %19 {strides = array<i32>} : memref<8x128xf32, #tpu.memory_space<vmem>>, vector<8x128xf32>,
    return
  }
  func.func @transform_0(%arg0: i32) -> (i32, i32) {
    %c0_i32 = arith.constant 0 : i32
    %c0_i32_0 = arith.constant 0 : i32
    return %arg0, %c0_i32 : i32, i32
  }
  func.func @transform_1(%arg0: i32) -> (i32, i32) {
    %c0_i32 = arith.constant 0 : i32
    %c0_i32_0 = arith.constant 0 : i32
    %c0_i32_1 = arith.constant 0 : i32
    return %c0_i32, %c0_i32_0 : i32, i32
  }
  func.func @transform_2(%arg0: i32) -> (i32, i32) {
    %c0_i32 = arith.constant 0 : i32
    %c0_i32_0 = arith.constant 0 : i32
    %c0_i32_1 = arith.constant 0 : i32
    return %c0_i32, %c0_i32_0 : i32, i32
  }
  func.func @transform_3(%arg0: i32) -> (i32, i32) {
    %c0_i32 = arith.constant 0 : i32
    %c0_i32_0 = arith.constant 0 : i32
    %c0_i32_1 = arith.constant 0 : i32
    return %c0_i32, %c0_i32_0 : i32, i32
  }
  func.func @transform_4(%arg0: i32) -> (i32, i32) {
    %c0_i32 = arith.constant 0 : i32
    %c0_i32_0 = arith.constant 0 : i32
    %c0_i32_1 = arith.constant 0 : i32
    return %c0_i32, %c0_i32_0 : i32, i32
  }
  func.func @transform_5(%arg0: i32) -> (i32, i32) {
    %c0_i32 = arith.constant 0 : i32
    %c0_i32_0 = arith.constant 0 : i32
    %c0_i32_1 = arith.constant 0 : i32
    return %c0_i32, %c0_i32_0 : i32, i32
  }
  func.func @transform_6(%arg0: i32) -> (i32, i32) {
    %c0_i32 = arith.constant 0 : i32
    %c0_i32_0 = arith.constant 0 : i32
    %c0_i32_1 = arith.constant 0 : i32
    return %c0_i32, %c0_i32_0 : i32, i32
  }
  func.func @transform_7(%arg0: i32) -> (i32, i32) {
    %c0_i32 = arith.constant 0 : i32
    %c0_i32_0 = arith.constant 0 : i32
    return %arg0, %c0_i32 : i32, i32
  }
}

</mosaic_0001>

<llo_original>
// kernel: dense_forward.1
$region0: #{dense_forward.1}
  #allocation0 [shape = 'u32[]', space=smem, size = 0x4, offset = 0x4, fixed_abs, tag = 'smem constant byte address 0x4 - core index']
  #allocation1 [shape = 'u32[144,128]{1,0:T(1,128)}', space=vmem, size = 0x12000, scoped, tag = 'internal scratch']
  %s0 = inlined_call_operand.hbm [shape: f32[8,32], index: 0, kind: input, shape index: {}]
  %s1 = inlined_call_operand.hbm [shape: f32[32,128], index: 1, kind: input, shape index: {}]
  %s2 = inlined_call_operand.vmem [shape: f32[1,128], index: 2, kind: input, shape index: {}]
  %s3 = inlined_call_operand.hbm [shape: f32[128,128], index: 3, kind: input, shape index: {}]
  %s4 = inlined_call_operand.vmem [shape: f32[1,128], index: 4, kind: input, shape index: {}]
  %s5 = inlined_call_operand.hbm [shape: f32[128,128], index: 5, kind: input, shape index: {}]
  %s6 = inlined_call_operand.vmem [shape: f32[1,128], index: 6, kind: input, shape index: {}]
  %s7 = inlined_call_operand.vmem [shape: f32[8,128], index: 7, kind: output, shape index: {}]
  %s8 = sld [smem:[#allocation0]]
  $region54: #{dense_forward.1} parent=0
    _
  %s10 = ssub.s32 1, %s8
  %s11 = scalar_select 0, %s10, %s8
  $region1: #{dense_forward.1} parent=0
    #allocation2 [shape = 'u8[4096]{0}', space=vmem, size = 0x1000, scoped, tag = 'input window, operand 0, single buffered']
    #allocation3 [shape = 's32[1]{0}', space=sflag, size = 0x4, scoped, tag = 'scoped memory for dense_forward.1']
    #allocation4 [shape = 'u8[16384]{0}', space=vmem, size = 0x4000, scoped, tag = 'input window, operand 1, single buffered']
    #allocation5 [shape = 's32[1]{0}', space=sflag, size = 0x4, scoped, tag = 'scoped memory for dense_forward.1']
    #allocation6 [shape = 'u8[65536]{0}', space=vmem, size = 0x10000, scoped, tag = 'input window, operand 3, single buffered']
    #allocation7 [shape = 'u8[65536]{0}', space=vmem, size = 0x10000, scoped, tag = 'input window, operand 5, single buffered']
    #allocation8 [shape = 's32[1]{0}', space=sflag, size = 0x4, scoped, tag = 'scoped memory for dense_forward.1']
    %12 = vsyncpa [#allocation3], 0
    %13 = vsyncpa [#allocation5], 0
    %14 = vsyncpa [#allocation8], 0
    // Predicated region
    $region2: #{dense_forward.1} parent=1 // pred_check
      _
    $region3: #{dense_forward.1} parent=1 // pred_check_branch
      %16 = sbr.rel (0) target = $region5
    $region4: #{dense_forward.1} parent=1 // pred_region
      %s18 = ssub.s32 128, 128
      %19 = vsyncadd [#allocation3], %s18
      %s21 = sshll.u32 [#allocation2], 4
      %s22 = int_to_ptr.vmem [resolvable:$true] %s21
      %24 = dma.hbm_to_vmem [thread:$0]  %s0, 128, %s22, [#allocation3]
    $region5: #{dense_forward.1} parent=1 // pred_fallthru
      _
    // Predicated region
    $region6: #{dense_forward.1} parent=1 // pred_check
      _
    $region7: #{dense_forward.1} parent=1 // pred_check_branch
      %26 = sbr.rel (0) target = $region9
    $region8: #{dense_forward.1} parent=1 // pred_region
      %s28 = ssub.s32 512, 512
      %29 = vsyncadd [#allocation5], %s28
      %s30 = sshll.u32 [#allocation4], 4
      %s31 = int_to_ptr.vmem [resolvable:$true] %s30
      %36 = dma.hbm_to_vmem [thread:$0]  %s1, 512, %s31, [#allocation5], 128, 128, 8
    $region9: #{dense_forward.1} parent=1 // pred_fallthru
      _
    // Predicated region
    $region10: #{dense_forward.1} parent=1 // pred_check
      _
    $region11: #{dense_forward.1} parent=1 // pred_check_branch
      %38 = sbr.rel (0) target = $region13
    $region12: #{dense_forward.1} parent=1 // pred_region
      _
    $region13: #{dense_forward.1} parent=1 // pred_fallthru
      _
    // Predicated region
    $region14: #{dense_forward.1} parent=1 // pred_check
      _
    $region15: #{dense_forward.1} parent=1 // pred_check_branch
      %40 = sbr.rel (0) target = $region17
    $region16: #{dense_forward.1} parent=1 // pred_region
      %s42 = ssub.s32 2048, 2048
      %43 = vsyncadd [#allocation5], %s42
      %s44 = sshll.u32 [#allocation6], 4
      %s45 = int_to_ptr.vmem [resolvable:$true] %s44
      %50 = dma.hbm_to_vmem [thread:$0]  %s3, 2048, %s45, [#allocation5], 128, 128, 8
    $region17: #{dense_forward.1} parent=1 // pred_fallthru
      _
    // Predicated region
    $region18: #{dense_forward.1} parent=1 // pred_check
      _
    $region19: #{dense_forward.1} parent=1 // pred_check_branch
      %52 = sbr.rel (0) target = $region21
    $region20: #{dense_forward.1} parent=1 // pred_region
      _
    $region21: #{dense_forward.1} parent=1 // pred_fallthru
      _
    // Predicated region
    $region22: #{dense_forward.1} parent=1 // pred_check
      _
    $region23: #{dense_forward.1} parent=1 // pred_check_branch
      %54 = sbr.rel (0) target = $region25
    $region24: #{dense_forward.1} parent=1 // pred_region
      %s56 = ssub.s32 2048, 2048
      %57 = vsyncadd [#allocation8], %s56
      %s58 = sshll.u32 [#allocation7], 4
      %s59 = int_to_ptr.vmem [resolvable:$true] %s58
      %64 = dma.hbm_to_vmem [thread:$0]  %s5, 2048, %s59, [#allocation8], 128, 128, 8
    $region25: #{dense_forward.1} parent=1 // pred_fallthru
      _
    // Predicated region
    $region26: #{dense_forward.1} parent=1 // pred_check
      _
    $region27: #{dense_forward.1} parent=1 // pred_check_branch
      %66 = sbr.rel (0) target = $region29
    $region28: #{dense_forward.1} parent=1 // pred_region
      _
    $region29: #{dense_forward.1} parent=1 // pred_fallthru
      _
    // Predicated region
    $region30: #{dense_forward.1} parent=1 // pred_check
      _
    $region31: #{dense_forward.1} parent=1 // pred_check_branch
      %68 = sbr.rel (0) target = $region33
    $region32: #{dense_forward.1} parent=1 // pred_region
      %69 = dma.done [#allocation3], 128
    $region33: #{dense_forward.1} parent=1 // pred_fallthru
      _
    // Predicated region
    $region34: #{dense_forward.1} parent=1 // pred_check
      _
    $region35: #{dense_forward.1} parent=1 // pred_check_branch
      %71 = sbr.rel (0) target = $region37
    $region36: #{dense_forward.1} parent=1 // pred_region
      %72 = dma.done [#allocation5], 512
    $region37: #{dense_forward.1} parent=1 // pred_fallthru
      _
    // Predicated region
    $region38: #{dense_forward.1} parent=1 // pred_check
      _
    $region39: #{dense_forward.1} parent=1 // pred_check_branch
      %74 = sbr.rel (0) target = $region41
    $region40: #{dense_forward.1} parent=1 // pred_region
      %75 = dma.done [#allocation5], 2048
    $region41: #{dense_forward.1} parent=1 // pred_fallthru
      _
    // Predicated region
    $region42: #{dense_forward.1} parent=1 // pred_check
      _
    $region43: #{dense_forward.1} parent=1 // pred_check_branch
      %77 = sbr.rel (0) target = $region45
    $region44: #{dense_forward.1} parent=1 // pred_region
      %78 = dma.done [#allocation8], 2048
    $region45: #{dense_forward.1} parent=1 // pred_fallthru
      _
    %v79 = vld [vmem:[#allocation2] sm:$0xff]
    %v80 = vld [vmem:[#allocation4] sm:$0xff]
    %v81 = vld [vmem:[#allocation4 + $0x8] sm:$0xff]
    %v82 = vld [vmem:[#allocation4 + $0x10] sm:$0xff]
    %v83 = vld [vmem:[#allocation4 + $0x18] sm:$0xff]
    %v84 = vld [vmem:[%s2] sm:$0x1]
    %v86 = vlaneseq
    %v87 = vshrl.u32 %v86, 7
    %v88 = vsub.s32 0, %v87
    %v89 = vrot.slane %v84, %v88
    %vm91 = vcmask 261120
    %v93 = vsel %vm91, %v79, 0
    %95 = vmatprep.subr.mxu0 0.0
    %96 = vmatpush1.msra.mxu0 0.0
    %97 = vmatprep.subr.mxu0 0.0
    %98 = vmatpush1.msra.mxu0 0.0
    %99 = vmatprep.subr.mxu0 0.0
    %100 = vmatpush1.msra.mxu0 0.0
    %101 = vmatprep.subr.mxu0 0.0
    %102 = vmatpush1.msra.mxu0 0.0
    %103 = vmatprep.subr.mxu0 0.0
    %104 = vmatpush1.msra.mxu0 0.0
    %105 = vmatprep.subr.mxu0 0.0
    %106 = vmatpush1.msra.mxu0 0.0
    %107 = vmatprep.subr.mxu0 0.0
    %108 = vmatpush1.msra.mxu0 0.0
    %109 = vmatprep.subr.mxu0 0.0
    %110 = vmatpush1.msra.mxu0 0.0
    %111 = vmatprep.subr.mxu0 0.0
    %112 = vmatpush1.msra.mxu0 0.0
    %113 = vmatprep.subr.mxu0 0.0
    %114 = vmatpush1.msra.mxu0 0.0
    %115 = vmatprep.subr.mxu0 0.0
    %116 = vmatpush1.msra.mxu0 0.0
    %117 = vmatprep.subr.mxu0 0.0
    %118 = vmatpush1.msra.mxu0 0.0
    %119 = vmatprep.subr.mxu0 0.0
    %120 = vmatpush1.msra.mxu0 %v83
    %121 = vmatprep.subr.mxu0 0.0
    %122 = vmatpush1.msra.mxu0 %v82
    %123 = vmatprep.subr.mxu0 0.0
    %124 = vmatpush1.msra.mxu0 %v81
    %125 = vmatprep.subr.mxu0 0.0
    %126 = vmatpush1.msra.mxu0 %v80
    %127 = vmatprep.subr.mxu0 0.0
    %128 = vmatpush2.msra.mxu0 0.0
    %129 = vmatprep.subr.mxu0 0.0
    %130 = vmatpush2.msra.mxu0 0.0
    %131 = vmatprep.subr.mxu0 0.0
    %132 = vmatpush2.msra.mxu0 0.0
    %133 = vmatprep.subr.mxu0 0.0
    %134 = vmatpush2.msra.mxu0 0.0
    %135 = vmatprep.subr.mxu0 0.0
    %136 = vmatpush2.msra.mxu0 0.0
    %137 = vmatprep.subr.mxu0 0.0
    %138 = vmatpush2.msra.mxu0 0.0
    %139 = vmatprep.subr.mxu0 0.0
    %140 = vmatpush2.msra.mxu0 0.0
    %141 = vmatprep.subr.mxu0 0.0
    %142 = vmatpush2.msra.mxu0 0.0
    %143 = vmatprep.subr.mxu0 0.0
    %144 = vmatpush2.msra.mxu0 0.0
    %145 = vmatprep.subr.mxu0 0.0
    %146 = vmatpush2.msra.mxu0 0.0
    %147 = vmatprep.subr.mxu0 0.0
    %148 = vmatpush2.msra.mxu0 0.0
    %149 = vmatprep.subr.mxu0 0.0
    %150 = vmatpush2.msra.mxu0 0.0
    %151 = vmatprep.subr.mxu0 0.0
    %152 = vmatpush2.msra.mxu0 0.0
    %153 = vmatprep.subr.mxu0 0.0
    %154 = vmatpush2.msra.mxu0 0.0
    %155 = vmatprep.subr.mxu0 0.0
    %156 = vmatpush2.msra.mxu0 0.0
    %157 = vmatprep.subr.mxu0 0.0
    %158 = vmatpush2.msra.mxu0 0.0
    %159 = vmatprep.mubr.f32.mxu0 0.0
    %160 = vmatmul.mubr.f32.gmra.mxu0 %v93
    %v161 = vpop.f32.mrf.mxu0
    %v162 = vadd.f32 %v89, %v161
    %v163 = vpop.f32.mrf.mxu0
    %164 = vdwg.mxu0
    %v165 = vmax.f32 %v162, 0.0
    %v166 = vld [vmem:[#allocation6] sm:$0xff]
    %v167 = vld [vmem:[#allocation6 + $0x8] sm:$0xff]
    %v168 = vld [vmem:[#allocation6 + $0x10] sm:$0xff]
    %v169 = vld [vmem:[#allocation6 + $0x18] sm:$0xff]
    %v170 = vld [vmem:[#allocation6 + $0x20] sm:$0xff]
    %v171 = vld [vmem:[#allocation6 + $0x28] sm:$0xff]
    %v172 = vld [vmem:[#allocation6 + $0x30] sm:$0xff]
    %v173 = vld [vmem:[#allocation6 + $0x38] sm:$0xff]
    %v174 = vld [vmem:[#allocation6 + $0x40] sm:$0xff]
    %v175 = vld [vmem:[#allocation6 + $0x48] sm:$0xff]
    %v176 = vld [vmem:[#allocation6 + $0x50] sm:$0xff]
    %v177 = vld [vmem:[#allocation6 + $0x58] sm:$0xff]
    %v178 = vld [vmem:[#allocation6 + $0x60] sm:$0xff]
    %v179 = vld [vmem:[#allocation6 + $0x68] sm:$0xff]
    %v180 = vld [vmem:[#allocation6 + $0x70] sm:$0xff]
    %v181 = vld [vmem:[#allocation6 + $0x78] sm:$0xff]
    %v182 = vld [vmem:[%s4] sm:$0x1]
    %v184 = vlaneseq
    %v185 = vshrl.u32 %v184, 7
    %v186 = vsub.s32 0, %v185
    %v187 = vrot.slane %v182, %v186
    %189 = vmatprep.subr.mxu0 0.0
    %190 = vmatpush1.msra.mxu0 %v181
    %191 = vmatprep.subr.mxu0 0.0
    %192 = vmatpush1.msra.mxu0 %v180
    %193 = vmatprep.subr.mxu0 0.0
    %194 = vmatpush1.msra.mxu0 %v179
    %195 = vmatprep.subr.mxu0 0.0
    %196 = vmatpush1.msra.mxu0 %v178
    %197 = vmatprep.subr.mxu0 0.0
    %198 = vmatpush1.msra.mxu0 %v177
    %199 = vmatprep.subr.mxu0 0.0
    %200 = vmatpush1.msra.mxu0 %v176
    %201 = vmatprep.subr.mxu0 0.0
    %202 = vmatpush1.msra.mxu0 %v175
    %203 = vmatprep.subr.mxu0 0.0
    %204 = vmatpush1.msra.mxu0 %v174
    %205 = vmatprep.subr.mxu0 0.0
    %206 = vmatpush1.msra.mxu0 %v173
    %207 = vmatprep.subr.mxu0 0.0
    %208 = vmatpush1.msra.mxu0 %v172
    %209 = vmatprep.subr.mxu0 0.0
    %210 = vmatpush1.msra.mxu0 %v171
    %211 = vmatprep.subr.mxu0 0.0
    %212 = vmatpush1.msra.mxu0 %v170
    %213 = vmatprep.subr.mxu0 0.0
    %214 = vmatpush1.msra.mxu0 %v169
    %215 = vmatprep.subr.mxu0 0.0
    %216 = vmatpush1.msra.mxu0 %v168
    %217 = vmatprep.subr.mxu0 0.0
    %218 = vmatpush1.msra.mxu0 %v167
    %219 = vmatprep.subr.mxu0 0.0
    %220 = vmatpush1.msra.mxu0 %v166
    %221 = vmatprep.subr.mxu0 0.0
    %222 = vmatpush2.msra.mxu0 0.0
    %223 = vmatprep.subr.mxu0 0.0
    %224 = vmatpush2.msra.mxu0 0.0
    %225 = vmatprep.subr.mxu0 0.0
    %226 = vmatpush2.msra.mxu0 0.0
    %227 = vmatprep.subr.mxu0 0.0
    %228 = vmatpush2.msra.mxu0 0.0
    %229 = vmatprep.subr.mxu0 0.0
    %230 = vmatpush2.msra.mxu0 0.0
    %231 = vmatprep.subr.mxu0 0.0
    %232 = vmatpush2.msra.mxu0 0.0
    %233 = vmatprep.subr.mxu0 0.0
    %234 = vmatpush2.msra.mxu0 0.0
    %235 = vmatprep.subr.mxu0 0.0
    %236 = vmatpush2.msra.mxu0 0.0
    %237 = vmatprep.subr.mxu0 0.0
    %238 = vmatpush2.msra.mxu0 0.0
    %239 = vmatprep.subr.mxu0 0.0
    %240 = vmatpush2.msra.mxu0 0.0
    %241 = vmatprep.subr.mxu0 0.0
    %242 = vmatpush2.msra.mxu0 0.0
    %243 = vmatprep.subr.mxu0 0.0
    %244 = vmatpush2.msra.mxu0 0.0
    %245 = vmatprep.subr.mxu0 0.0
    %246 = vmatpush2.msra.mxu0 0.0
    %247 = vmatprep.subr.mxu0 0.0
    %248 = vmatpush2.msra.mxu0 0.0
    %249 = vmatprep.subr.mxu0 0.0
    %250 = vmatpush2.msra.mxu0 0.0
    %251 = vmatprep.subr.mxu0 0.0
    %252 = vmatpush2.msra.mxu0 0.0
    %253 = vmatprep.mubr.f32.mxu0 0.0
    %254 = vmatmul.mubr.f32.gmra.mxu0 %v165
    %v255 = vpop.f32.mrf.mxu0
    %v256 = vadd.f32 %v187, %v255
    %v257 = vpop.f32.mrf.mxu0
    %258 = vdwg.mxu0
    %v259 = vmax.f32 %v256, 0.0
    %v260 = vld [vmem:[#allocation7] sm:$0xff]
    %v261 = vld [vmem:[#allocation7 + $0x8] sm:$0xff]
    %v262 = vld [vmem:[#allocation7 + $0x10] sm:$0xff]
    %v263 = vld [vmem:[#allocation7 + $0x18] sm:$0xff]
    %v264 = vld [vmem:[#allocation7 + $0x20] sm:$0xff]
    %v265 = vld [vmem:[#allocation7 + $0x28] sm:$0xff]
    %v266 = vld [vmem:[#allocation7 + $0x30] sm:$0xff]
    %v267 = vld [vmem:[#allocation7 + $0x38] sm:$0xff]
    %v268 = vld [vmem:[#allocation7 + $0x40] sm:$0xff]
    %v269 = vld [vmem:[#allocation7 + $0x48] sm:$0xff]
    %v270 = vld [vmem:[#allocation7 + $0x50] sm:$0xff]
    %v271 = vld [vmem:[#allocation7 + $0x58] sm:$0xff]
    %v272 = vld [vmem:[#allocation7 + $0x60] sm:$0xff]
    %v273 = vld [vmem:[#allocation7 + $0x68] sm:$0xff]
    %v274 = vld [vmem:[#allocation7 + $0x70] sm:$0xff]
    %v275 = vld [vmem:[#allocation7 + $0x78] sm:$0xff]
    %v276 = vld [vmem:[%s6] sm:$0x1]
    %v278 = vlaneseq
    %v279 = vshrl.u32 %v278, 7
    %v280 = vsub.s32 0, %v279
    %v281 = vrot.slane %v276, %v280
    %283 = vmatprep.subr.mxu0 0.0
    %284 = vmatpush1.msra.mxu0 %v275
    %285 = vmatprep.subr.mxu0 0.0
    %286 = vmatpush1.msra.mxu0 %v274
    %287 = vmatprep.subr.mxu0 0.0
    %288 = vmatpush1.msra.mxu0 %v273
    %289 = vmatprep.subr.mxu0 0.0
    %290 = vmatpush1.msra.mxu0 %v272
    %291 = vmatprep.subr.mxu0 0.0
    %292 = vmatpush1.msra.mxu0 %v271
    %293 = vmatprep.subr.mxu0 0.0
    %294 = vmatpush1.msra.mxu0 %v270
    %295 = vmatprep.subr.mxu0 0.0
    %296 = vmatpush1.msra.mxu0 %v269
    %297 = vmatprep.subr.mxu0 0.0
    %298 = vmatpush1.msra.mxu0 %v268
    %299 = vmatprep.subr.mxu0 0.0
    %300 = vmatpush1.msra.mxu0 %v267
    %301 = vmatprep.subr.mxu0 0.0
    %302 = vmatpush1.msra.mxu0 %v266
    %303 = vmatprep.subr.mxu0 0.0
    %304 = vmatpush1.msra.mxu0 %v265
    %305 = vmatprep.subr.mxu0 0.0
    %306 = vmatpush1.msra.mxu0 %v264
    %307 = vmatprep.subr.mxu0 0.0
    %308 = vmatpush1.msra.mxu0 %v263
    %309 = vmatprep.subr.mxu0 0.0
    %310 = vmatpush1.msra.mxu0 %v262
    %311 = vmatprep.subr.mxu0 0.0
    %312 = vmatpush1.msra.mxu0 %v261
    %313 = vmatprep.subr.mxu0 0.0
    %314 = vmatpush1.msra.mxu0 %v260
    %315 = vmatprep.subr.mxu0 0.0
    %316 = vmatpush2.msra.mxu0 0.0
    %317 = vmatprep.subr.mxu0 0.0
    %318 = vmatpush2.msra.mxu0 0.0
    %319 = vmatprep.subr.mxu0 0.0
    %320 = vmatpush2.msra.mxu0 0.0
    %321 = vmatprep.subr.mxu0 0.0
    %322 = vmatpush2.msra.mxu0 0.0
    %323 = vmatprep.subr.mxu0 0.0
    %324 = vmatpush2.msra.mxu0 0.0
    %325 = vmatprep.subr.mxu0 0.0
    %326 = vmatpush2.msra.mxu0 0.0
    %327 = vmatprep.subr.mxu0 0.0
    %328 = vmatpush2.msra.mxu0 0.0
    %329 = vmatprep.subr.mxu0 0.0
    %330 = vmatpush2.msra.mxu0 0.0
    %331 = vmatprep.subr.mxu0 0.0
    %332 = vmatpush2.msra.mxu0 0.0
    %333 = vmatprep.subr.mxu0 0.0
    %334 = vmatpush2.msra.mxu0 0.0
    %335 = vmatprep.subr.mxu0 0.0
    %336 = vmatpush2.msra.mxu0 0.0
    %337 = vmatprep.subr.mxu0 0.0
    %338 = vmatpush2.msra.mxu0 0.0
    %339 = vmatprep.subr.mxu0 0.0
    %340 = vmatpush2.msra.mxu0 0.0
    %341 = vmatprep.subr.mxu0 0.0
    %342 = vmatpush2.msra.mxu0 0.0
    %343 = vmatprep.subr.mxu0 0.0
    %344 = vmatpush2.msra.mxu0 0.0
    %345 = vmatprep.subr.mxu0 0.0
    %346 = vmatpush2.msra.mxu0 0.0
    %347 = vmatprep.mubr.f32.mxu0 0.0
    %348 = vmatmul.mubr.f32.gmra.mxu0 %v259
    %v349 = vpop.f32.mrf.mxu0
    %v350 = vadd.f32 %v281, %v349
    %v351 = vpop.f32.mrf.mxu0
    %352 = vdwg.mxu0
    %353 = vst [vmem:[%s7] sm:$0xff] %v350
    // Predicated region
    $region46: #{dense_forward.1} parent=1 // pred_check
      _
    $region47: #{dense_forward.1} parent=1 // pred_check_branch
      %355 = sbr.rel (0) target = $region49
    $region48: #{dense_forward.1} parent=1 // pred_region
      _
    $region49: #{dense_forward.1} parent=1 // pred_fallthru
      _
    // Predicated region
    $region50: #{dense_forward.1} parent=1 // pred_check
      _
    $region51: #{dense_forward.1} parent=1 // pred_check_branch
      %357 = sbr.rel (0) target = $region53
    $region52: #{dense_forward.1} parent=1 // pred_region
      _
    $region53: #{dense_forward.1} parent=1 // pred_fallthru
      _
    %358 = vsyncpa [#allocation3], 1
    %359 = vsyncpa [#allocation5], 1
    %360 = vsyncpa [#allocation8], 1

</llo_original>
